<compile_context>
chip_gen: v7x
topology: tpu7x:2x2x1
jax: 0.10.0
libtpu: 0.0.40
codegen_flags: <defaults>
</compile_context>

<pallas_src>
import functools

import jax
import jax.numpy as jnp
from jax.experimental import pallas as pl
from jax.experimental.pallas import tpu as pltpu

NEG_SLOPE = 0.01   # F.leaky_relu default
BN_EPS = 1e-5      # nn.BatchNorm2d default


def _leaky_relu(x):
    return jnp.where(x > 0, x, NEG_SLOPE * x)


def _round_up(n, m):
    return (n + m - 1) // m * m


# ---------------------------------------------------------------------------
# Fused kernel (per grid step: block_b images):
#   depthwise3x3 -> pointwise1x1(+BN1) -> lrelu -> depthwise3x3(+BN2) -> lrelu
# Activations use the "merged lane" layout: last dim = W*C with lane index w*C + c.
# ---------------------------------------------------------------------------
def _lsfe_fused_kernel(x_ref, wdw1_ref, w1_ref, c1_ref, wdw2_ref, c2_ref,
                       out_ref, xpad, ypad, *, H, W, Cin, Cout, Bblk, LIN):
    WCin = W * Cin
    WCout = W * Cout
    f32 = jnp.float32

    # ---------------- stage 1: depthwise 3x3 ------------------------------
    # xpad per image: rows [1, H] hold data (row 0 / H+1 = vertical halo); lanes
    # [Cin, Cin+WCin) hold data (lanes [0,Cin) and [Cin+WCin,(W+2)*Cin) = horiz. halo).
    # Only the halo is cleared, every step (cheap; interior is fully overwritten).
    xpad[:, 0:1, :] = jnp.zeros((Bblk, 1, LIN), f32)
    xpad[:, H + 1:H + 2, :] = jnp.zeros((Bblk, 1, LIN), f32)
    xpad[:, :, 0:Cin] = jnp.zeros((Bblk, H + 2, Cin), f32)
    xpad[:, :, Cin + WCin:(W + 2) * Cin] = jnp.zeros((Bblk, H + 2, Cin), f32)
    xpad[:, 1:H + 1, Cin:Cin + WCin] = x_ref[...].astype(f32)

    acc = xpad[:, 0:H, 0:WCin] * wdw1_ref[0, :]                       # kh=0, kw=0
    for k in range(1, 9):
        kh, kw = divmod(k, 3)
        acc = acc + xpad[:, kh:kh + H, kw * Cin:kw * Cin + WCin] * wdw1_ref[k, :]

    # -------- pointwise 1x1 (+ folded BN1 scale): one MXU matmul ----------
    # Batch is stacked into M: (Bblk*H, W*Cin) @ (W*Cin, W*Cout).
    y = jnp.dot(acc.reshape(Bblk * H, WCin), w1_ref[...],
                preferred_element_type=jnp.float32)
    y = _leaky_relu(y + c1_ref[...])                                  # (Bblk*H, W*Cout)

    # -------------- stage 2: depthwise 3x3 (+ folded BN2) -----------------
    # Only the vertical (kh) halo is staged in VMEM, lane-dense at offset 0.
    # Horizontal (kw) taps use pltpu.roll (XLU) + edge masks in-register.
    ypad[:, 1:H + 1, 0:WCout] = y.reshape(Bblk, H, WCout)
    ypad[:, 0:1, 0:WCout] = jnp.zeros((Bblk, 1, WCout), f32)
    ypad[:, H + 1:H + 2, 0:WCout] = jnp.zeros((Bblk, 1, WCout), f32)

    lane = jax.lax.broadcasted_iota(jnp.int32, (Bblk * H, WCout), 1)
    has_left = lane >= Cout             # w >= 1     (kw = 0 neighbour exists)
    has_right = lane < WCout - Cout     # w <= W-2   (kw = 2 neighbour exists)

    z = None
    for kh in range(3):
        yk = ypad[:, kh:kh + H, 0:WCout].reshape(Bblk * H, WCout)
        t_left = jnp.where(has_left, pltpu.roll(yk, shift=Cout, axis=1), 0.0)
        t_right = jnp.where(has_right, pltpu.roll(yk, shift=WCout - Cout, axis=1), 0.0)
        for kw, tap in ((0, t_left), (1, yk), (2, t_right)):
            term = tap * wdw2_ref[kh * 3 + kw, :]
            z = term if z is None else z + term
    z = z + c2_ref[...]

    out_ref[...] = _leaky_relu(z).reshape(Bblk, H, WCout).astype(out_ref.dtype)


# ---------------------------------------------------------------------------
# Wrapper
# ---------------------------------------------------------------------------
def _pick_block_b(B, H):
    """Largest divisor of B with M = block_b*H around 256, keeping >=2 grid steps
    (when B >= 2) so both v7x TensorCores get work."""
    cap = max(1, 256 // max(H, 1))
    if B >= 2:
        cap = min(cap, max(1, B // 2))
    cap = min(cap, B)
    return max(d for d in range(1, cap + 1) if B % d == 0)


def lsfe_forward(x, params, *, block_b=None, data_format="NCHW"):
    """Full LSFE forward (depthwise_conv=True).  data_format 'NCHW' (PyTorch layout)
    or 'NHWC' (skips the wrapper transposes -- preferred for end-to-end perf)."""
    if data_format == "NCHW":
        B, Cin, H, W = x.shape
        x_m = jnp.transpose(x, (0, 2, 3, 1)).reshape(B, H, W * Cin)
    elif data_format == "NHWC":
        B, H, W, Cin = x.shape
        x_m = x.reshape(B, H, W * Cin)
    else:
        raise ValueError(data_format)

    Cout = params["w_pw1"].shape[1]
    f32 = jnp.float32
    WCin, WCout = W * Cin, W * Cout

    if block_b is None:
        block_b = _pick_block_b(B, H)
    assert B % block_b == 0, (B, block_b)

    # ---- fold BatchNorm (eval mode) + all conv biases on the host ---------
    scale1 = params["gamma1"] * jax.lax.rsqrt(params["var1"] + BN_EPS)
    shift1 = params["beta1"] - params["mean1"] * scale1
    scale2 = params["gamma2"] * jax.lax.rsqrt(params["var2"] + BN_EPS)
    shift2 = params["beta2"] - params["mean2"] * scale2

    w1_eff = params["w_pw1"] * scale1[None, :]                                # (Cin, Cout)
    c1_eff = (params["b_dw1"] @ params["w_pw1"] + params["b_pw1"]) * scale1 + shift1
    wdw2_eff = params["w_dw2"] * scale2[None, None, :]                        # (3, 3, Cout)
    c2_eff = params["b_dw2"] * scale2 + shift2

    # ---- merged-lane (w*C + c) weight layouts (tiny, one-time, host side) --
    wdw1_m = jnp.tile(params["w_dw1"].reshape(9, Cin).astype(f32), (1, W))    # (9, W*Cin)
    w1_blk = jnp.kron(jnp.eye(W, dtype=f32), w1_eff.astype(f32))              # (W*Cin, W*Cout)
    c1_m = jnp.tile(c1_eff.astype(f32), W).reshape(1, WCout)
    wdw2_m = jnp.tile(wdw2_eff.reshape(9, Cout).astype(f32), (1, W))          # (9, W*Cout)
    c2_m = jnp.tile(c2_eff.astype(f32), W).reshape(1, WCout)

    LIN = _round_up((W + 2) * Cin, 128)     # stage-1 pad slab lane width
    LOUT = _round_up(WCout, 128)            # stage-2 pad slab lane width

    kernel = functools.partial(_lsfe_fused_kernel, H=H, W=W, Cin=Cin, Cout=Cout,
                               Bblk=block_b, LIN=LIN)

    out_m = pl.pallas_call(
        kernel,
        out_shape=jax.ShapeDtypeStruct((B, H, WCout), x.dtype),
        grid=(B // block_b,),
        in_specs=[
            pl.BlockSpec((block_b, H, WCin), lambda b: (b, 0, 0)),
            pl.BlockSpec((9, WCin), lambda b: (0, 0)),
            pl.BlockSpec((WCin, WCout), lambda b: (0, 0)),
            pl.BlockSpec((1, WCout), lambda b: (0, 0)),
            pl.BlockSpec((9, WCout), lambda b: (0, 0)),
            pl.BlockSpec((1, WCout), lambda b: (0, 0)),
        ],
        out_specs=pl.BlockSpec((block_b, H, WCout), lambda b: (b, 0, 0)),
        scratch_shapes=[
            pltpu.VMEM((block_b, H + 2, LIN), jnp.float32),    # stage-1 padded input
            pltpu.VMEM((block_b, H + 2, LOUT), jnp.float32),   # stage-1 output, row halo
        ],
        compiler_params=pltpu.CompilerParams(
            dimension_semantics=("parallel",),
            vmem_limit_bytes=32 * 1024 * 1024,
        ),
    )(x_m, wdw1_m, w1_blk, c1_m, wdw2_m, c2_m)

    out_nhwc = out_m.reshape(B, H, W, Cout)
    if data_format == "NHWC":
        return out_nhwc
    return jnp.transpose(out_nhwc, (0, 3, 1, 2))


# ---------------------------------------------------------------------------
# Pure-JAX reference (for verification)
# ---------------------------------------------------------------------------
def _ref_forward(x_nchw, params):
    Cin = x_nchw.shape[1]
    Cout = params["w_pw1"].shape[1]
    dn = jax.lax.conv_dimension_numbers(x_nchw.shape, (1, 1, 3, 3),
                                        ("NCHW", "OIHW", "NCHW"))

    # stage 1: depthwise 3x3
    w_dw1 = jnp.transpose(params["w_dw1"], (2, 0, 1))[:, None, :, :]    # (Cin,1,3,3)
    y = jax.lax.conv_general_dilated(x_nchw, w_dw1, (1, 1), ((1, 1), (1, 1)),
                                     dimension_numbers=dn, feature_group_count=Cin)
    y = y + params["b_dw1"].reshape(1, Cin, 1, 1)
    # pointwise 1x1
    w_pw1 = jnp.transpose(params["w_pw1"], (1, 0))[:, :, None, None]    # (Cout,Cin,1,1)
    y = jax.lax.conv_general_dilated(y, w_pw1, (1, 1), ((0, 0), (0, 0)),
                                     dimension_numbers=dn)
    y = y + params["b_pw1"].reshape(1, Cout, 1, 1)
    # BN (eval) + leaky relu
    y = (y - params["mean1"].reshape(1, Cout, 1, 1)) / jnp.sqrt(
        params["var1"].reshape(1, Cout, 1, 1) + BN_EPS)
    y = y * params["gamma1"].reshape(1, Cout, 1, 1) + params["beta1"].reshape(1, Cout, 1, 1)
    y = _leaky_relu(y)

    # stage 2: depthwise 3x3
    w_dw2 = jnp.transpose(params["w_dw2"], (2, 0, 1))[:, None, :, :]    # (Cout,1,3,3)
    z = jax.lax.conv_general_dilated(y, w_dw2, (1, 1), ((1, 1), (1, 1)),
                                     dimension_numbers=dn, feature_group_count=Cout)
    z = z + params["b_dw2"].reshape(1, Cout, 1, 1)
    z = (z - params["mean2"].reshape(1, Cout, 1, 1)) / jnp.sqrt(
        params["var2"].reshape(1, Cout, 1, 1) + BN_EPS)
    z = z * params["gamma2"].reshape(1, Cout, 1, 1) + params["beta2"].reshape(1, Cout, 1, 1)
    return _leaky_relu(z)


# ---------------------------------------------------------------------------
if __name__ == "__main__":
    Cin, Cout, H, W = 4, 8, 16, 16

    key = jax.random.PRNGKey(0)
    ks = jax.random.split(key, 14)
    params = {
        "w_dw1": jax.random.normal(ks[0], (3, 3, Cin), jnp.float32) * 0.2,
        "b_dw1": jax.random.normal(ks[1], (Cin,), jnp.float32) * 0.1,
        "w_pw1": jax.random.normal(ks[2], (Cin, Cout), jnp.float32) * 0.2,
        "b_pw1": jax.random.normal(ks[3], (Cout,), jnp.float32) * 0.1,
        "gamma1": 1.0 + 0.1 * jax.random.normal(ks[4], (Cout,), jnp.float32),
        "beta1": 0.1 * jax.random.normal(ks[5], (Cout,), jnp.float32),
        "mean1": 0.1 * jax.random.normal(ks[6], (Cout,), jnp.float32),
        "var1": jax.random.uniform(ks[7], (Cout,), jnp.float32, 0.5, 1.5),
        "w_dw2": jax.random.normal(ks[8], (3, 3, Cout), jnp.float32) * 0.2,
        "b_dw2": jax.random.normal(ks[9], (Cout,), jnp.float32) * 0.1,
        "gamma2": 1.0 + 0.1 * jax.random.normal(ks[10], (Cout,), jnp.float32),
        "beta2": 0.1 * jax.random.normal(ks[11], (Cout,), jnp.float32),
        "mean2": 0.1 * jax.random.normal(ks[12], (Cout,), jnp.float32),
        "var2": jax.random.uniform(ks[13], (Cout,), jnp.float32, 0.5, 1.5),
    }

    # --- main demo shape (block_b = 1, 2 grid steps) ------------------------
    x = jax.random.normal(jax.random.PRNGKey(42), (2, Cin, H, W), jnp.float32)
    out = jax.block_until_ready(lsfe_forward(x, params))
    ref = jax.block_until_ready(_ref_forward(x, params))
    assert out.shape == (2, Cout, H, W), out.shape
    err = float(jnp.max(jnp.abs(out - ref)))
    assert jnp.allclose(out, ref, atol=2e-4, rtol=2e-4), err

    # --- exercise the batch-blocked path (block_b = 4, 2 grid steps) --------
    x8 = jax.random.normal(jax.random.PRNGKey(7), (8, Cin, H, W), jnp.float32)
    out8 = jax.block_until_ready(lsfe_forward(x8, params))
    ref8 = jax.block_until_ready(_ref_forward(x8, params))
    err8 = float(jnp.max(jnp.abs(out8 - ref8)))
    assert jnp.allclose(out8, ref8, atol=2e-4, rtol=2e-4), err8

    print("KERNEL_OK")
</pallas_src>

<mosaic_0001>
module attributes {stable_mosaic.version = 11 : i64} {
  func.func @_lsfe_fused_kernel(%arg0: i32, %arg1: memref<1x16x64xf32, #tpu.memory_space<vmem>>, %arg2: memref<9x64xf32, #tpu.memory_space<vmem>>, %arg3: memref<64x128xf32, #tpu.memory_space<vmem>>, %arg4: memref<1x128xf32, #tpu.memory_space<vmem>>, %arg5: memref<9x128xf32, #tpu.memory_space<vmem>>, %arg6: memref<1x128xf32, #tpu.memory_space<vmem>>, %arg7: memref<1x16x128xf32, #tpu.memory_space<vmem>>, %arg8: memref<1x18x128xf32, #tpu.memory_space<vmem>>, %arg9: memref<1x18x128xf32, #tpu.memory_space<vmem>>) attributes {dimension_semantics = [#tpu.dimension_semantics<parallel>], iteration_bounds = array<i64: 2>, scalar_prefetch = 0 : i64, scratch_operands = 2 : i64, tpu.core_type = #tpu.core_type<tc>, window_params = [{transform_indices = @transform_0, window_bounds = array<i64: 1, 16, 64>}, {pipeline_mode = #tpu.pipeline_mode<synchronous>, transform_indices = @transform_1, window_bounds = array<i64: 9, 64>}, {pipeline_mode = #tpu.pipeline_mode<synchronous>, transform_indices = @transform_2, window_bounds = array<i64: 64, 128>}, {pipeline_mode = #tpu.pipeline_mode<synchronous>, transform_indices = @transform_3, window_bounds = array<i64: 1, 128>}, {pipeline_mode = #tpu.pipeline_mode<synchronous>, transform_indices = @transform_4, window_bounds = array<i64: 9, 128>}, {pipeline_mode = #tpu.pipeline_mode<synchronous>, transform_indices = @transform_5, window_bounds = array<i64: 1, 128>}, {transform_indices = @transform_6, window_bounds = array<i64: 1, 16, 128>}]} {
    %cst = arith.constant 0.000000e+00 : f32
    %0 = vector.broadcast %cst : f32 to vector<1x1x128xf32>
    %c0 = arith.constant 0 : index
    %c0_0 = arith.constant 0 : index
    %c0_1 = arith.constant 0 : index
    %1 = vector.load %arg8[%c0, %c0_0, %c0_1] : memref<1x18x128xf32, #tpu.memory_space<vmem>>, vector<1x1x128xf32>
    tpu.vector_store %arg8[%c0, %c0_0, %c0_1], %0 {strides = array<i32>} : memref<1x18x128xf32, #tpu.memory_space<vmem>>, vector<1x1x128xf32>,
    %cst_2 = arith.constant 0.000000e+00 : f32
    %2 = vector.broadcast %cst_2 : f32 to vector<1x1x128xf32>
    %c0_3 = arith.constant 0 : index
    %c17 = arith.constant 17 : index
    %c0_4 = arith.constant 0 : index
    %3 = vector.load %arg8[%c0_3, %c17, %c0_4] : memref<1x18x128xf32, #tpu.memory_space<vmem>>, vector<1x1x128xf32>
    tpu.vector_store %arg8[%c0_3, %c17, %c0_4], %2 {strides = array<i32>} : memref<1x18x128xf32, #tpu.memory_space<vmem>>, vector<1x1x128xf32>,
    %cst_5 = arith.constant 0.000000e+00 : f32
    %4 = vector.broadcast %cst_5 : f32 to vector<1x18x4xf32>
    %c0_6 = arith.constant 0 : index
    %c0_7 = arith.constant 0 : index
    %c0_8 = arith.constant 0 : index
    %5 = vector.load %arg8[%c0_6, %c0_7, %c0_8] : memref<1x18x128xf32, #tpu.memory_space<vmem>>, vector<1x18x4xf32>
    tpu.vector_store %arg8[%c0_6, %c0_7, %c0_8], %4 {strides = array<i32>} : memref<1x18x128xf32, #tpu.memory_space<vmem>>, vector<1x18x4xf32>,
    %cst_9 = arith.constant 0.000000e+00 : f32
    %6 = vector.broadcast %cst_9 : f32 to vector<1x18x4xf32>
    %c0_10 = arith.constant 0 : index
    %c0_11 = arith.constant 0 : index
    %c68 = arith.constant 68 : index
    %7 = vector.load %arg8[%c0_10, %c0_11, %c68] : memref<1x18x128xf32, #tpu.memory_space<vmem>>, vector<1x18x4xf32>
    tpu.vector_store %arg8[%c0_10, %c0_11, %c68], %6 {strides = array<i32>} : memref<1x18x128xf32, #tpu.memory_space<vmem>>, vector<1x18x4xf32>,
    %c0_12 = arith.constant 0 : index
    %c0_13 = arith.constant 0 : index
    %c0_14 = arith.constant 0 : index
    %8 = vector.load %arg1[%c0_12, %c0_13, %c0_14] : memref<1x16x64xf32, #tpu.memory_space<vmem>>, vector<1x16x64xf32>
    %c0_15 = arith.constant 0 : index
    %c1 = arith.constant 1 : index
    %c4 = arith.constant 4 : index
    %9 = vector.load %arg8[%c0_15, %c1, %c4] : memref<1x18x128xf32, #tpu.memory_space<vmem>>, vector<1x16x64xf32>
    tpu.vector_store %arg8[%c0_15, %c1, %c4], %8 {strides = array<i32>} : memref<1x18x128xf32, #tpu.memory_space<vmem>>, vector<1x16x64xf32>,
    %c0_16 = arith.constant 0 : index
    %c0_17 = arith.constant 0 : index
    %c0_18 = arith.constant 0 : index
    %10 = vector.load %arg8[%c0_16, %c0_17, %c0_18] : memref<1x18x128xf32, #tpu.memory_space<vmem>>, vector<1x16x64xf32>
    %c0_19 = arith.constant 0 : index
    %c0_20 = arith.constant 0 : index
    %11 = vector.load %arg2[%c0_19, %c0_20] : memref<9x64xf32, #tpu.memory_space<vmem>>, vector<1x64xf32>
    %12 = vector.shape_cast %11 : vector<1x64xf32> to vector<64xf32>
    %13 = vector.shape_cast %12 : vector<64xf32> to vector<1x1x64xf32>
    %14 = vector.broadcast %13 : vector<1x1x64xf32> to vector<1x16x64xf32>
    %15 = arith.mulf %10, %14 : vector<1x16x64xf32>
    %c0_21 = arith.constant 0 : index
    %c0_22 = arith.constant 0 : index
    %c4_23 = arith.constant 4 : index
    %16 = vector.load %arg8[%c0_21, %c0_22, %c4_23] : memref<1x18x128xf32, #tpu.memory_space<vmem>>, vector<1x16x64xf32>
    %c1_24 = arith.constant 1 : index
    %c0_25 = arith.constant 0 : index
    %17 = vector.load %arg2[%c1_24, %c0_25] : memref<9x64xf32, #tpu.memory_space<vmem>>, vector<1x64xf32>
    %18 = vector.shape_cast %17 : vector<1x64xf32> to vector<64xf32>
    %19 = vector.shape_cast %18 : vector<64xf32> to vector<1x1x64xf32>
    %20 = vector.broadcast %19 : vector<1x1x64xf32> to vector<1x16x64xf32>
    %21 = arith.mulf %16, %20 : vector<1x16x64xf32>
    %22 = arith.addf %15, %21 : vector<1x16x64xf32>
    %c0_26 = arith.constant 0 : index
    %c0_27 = arith.constant 0 : index
    %c8 = arith.constant 8 : index
    %23 = vector.load %arg8[%c0_26, %c0_27, %c8] : memref<1x18x128xf32, #tpu.memory_space<vmem>>, vector<1x16x64xf32>
    %c2 = arith.constant 2 : index
    %c0_28 = arith.constant 0 : index
    %24 = vector.load %arg2[%c2, %c0_28] : memref<9x64xf32, #tpu.memory_space<vmem>>, vector<1x64xf32>
    %25 = vector.shape_cast %24 : vector<1x64xf32> to vector<64xf32>
    %26 = vector.shape_cast %25 : vector<64xf32> to vector<1x1x64xf32>
    %27 = vector.broadcast %26 : vector<1x1x64xf32> to vector<1x16x64xf32>
    %28 = arith.mulf %23, %27 : vector<1x16x64xf32>
    %29 = arith.addf %22, %28 : vector<1x16x64xf32>
    %c0_29 = arith.constant 0 : index
    %c1_30 = arith.constant 1 : index
    %c0_31 = arith.constant 0 : index
    %30 = vector.load %arg8[%c0_29, %c1_30, %c0_31] : memref<1x18x128xf32, #tpu.memory_space<vmem>>, vector<1x16x64xf32>
    %c3 = arith.constant 3 : index
    %c0_32 = arith.constant 0 : index
    %31 = vector.load %arg2[%c3, %c0_32] : memref<9x64xf32, #tpu.memory_space<vmem>>, vector<1x64xf32>
    %32 = vector.shape_cast %31 : vector<1x64xf32> to vector<64xf32>
    %33 = vector.shape_cast %32 : vector<64xf32> to vector<1x1x64xf32>
    %34 = vector.broadcast %33 : vector<1x1x64xf32> to vector<1x16x64xf32>
    %35 = arith.mulf %30, %34 : vector<1x16x64xf32>
    %36 = arith.addf %29, %35 : vector<1x16x64xf32>
    %c0_33 = arith.constant 0 : index
    %c1_34 = arith.constant 1 : index
    %c4_35 = arith.constant 4 : index
    %37 = vector.load %arg8[%c0_33, %c1_34, %c4_35] : memref<1x18x128xf32, #tpu.memory_space<vmem>>, vector<1x16x64xf32>
    %c4_36 = arith.constant 4 : index
    %c0_37 = arith.constant 0 : index
    %38 = vector.load %arg2[%c4_36, %c0_37] : memref<9x64xf32, #tpu.memory_space<vmem>>, vector<1x64xf32>
    %39 = vector.shape_cast %38 : vector<1x64xf32> to vector<64xf32>
    %40 = vector.shape_cast %39 : vector<64xf32> to vector<1x1x64xf32>
    %41 = vector.broadcast %40 : vector<1x1x64xf32> to vector<1x16x64xf32>
    %42 = arith.mulf %37, %41 : vector<1x16x64xf32>
    %43 = arith.addf %36, %42 : vector<1x16x64xf32>
    %c0_38 = arith.constant 0 : index
    %c1_39 = arith.constant 1 : index
    %c8_40 = arith.constant 8 : index
    %44 = vector.load %arg8[%c0_38, %c1_39, %c8_40] : memref<1x18x128xf32, #tpu.memory_space<vmem>>, vector<1x16x64xf32>
    %c5 = arith.constant 5 : index
    %c0_41 = arith.constant 0 : index
    %45 = vector.load %arg2[%c5, %c0_41] : memref<9x64xf32, #tpu.memory_space<vmem>>, vector<1x64xf32>
    %46 = vector.shape_cast %45 : vector<1x64xf32> to vector<64xf32>
    %47 = vector.shape_cast %46 : vector<64xf32> to vector<1x1x64xf32>
    %48 = vector.broadcast %47 : vector<1x1x64xf32> to vector<1x16x64xf32>
    %49 = arith.mulf %44, %48 : vector<1x16x64xf32>
    %50 = arith.addf %43, %49 : vector<1x16x64xf32>
    %c0_42 = arith.constant 0 : index
    %c2_43 = arith.constant 2 : index
    %c0_44 = arith.constant 0 : index
    %51 = vector.load %arg8[%c0_42, %c2_43, %c0_44] : memref<1x18x128xf32, #tpu.memory_space<vmem>>, vector<1x16x64xf32>
    %c6 = arith.constant 6 : index
    %c0_45 = arith.constant 0 : index
    %52 = vector.load %arg2[%c6, %c0_45] : memref<9x64xf32, #tpu.memory_space<vmem>>, vector<1x64xf32>
    %53 = vector.shape_cast %52 : vector<1x64xf32> to vector<64xf32>
    %54 = vector.shape_cast %53 : vector<64xf32> to vector<1x1x64xf32>
    %55 = vector.broadcast %54 : vector<1x1x64xf32> to vector<1x16x64xf32>
    %56 = arith.mulf %51, %55 : vector<1x16x64xf32>
    %57 = arith.addf %50, %56 : vector<1x16x64xf32>
    %c0_46 = arith.constant 0 : index
    %c2_47 = arith.constant 2 : index
    %c4_48 = arith.constant 4 : index
    %58 = vector.load %arg8[%c0_46, %c2_47, %c4_48] : memref<1x18x128xf32, #tpu.memory_space<vmem>>, vector<1x16x64xf32>
    %c7 = arith.constant 7 : index
    %c0_49 = arith.constant 0 : index
    %59 = vector.load %arg2[%c7, %c0_49] : memref<9x64xf32, #tpu.memory_space<vmem>>, vector<1x64xf32>
    %60 = vector.shape_cast %59 : vector<1x64xf32> to vector<64xf32>
    %61 = vector.shape_cast %60 : vector<64xf32> to vector<1x1x64xf32>
    %62 = vector.broadcast %61 : vector<1x1x64xf32> to vector<1x16x64xf32>
    %63 = arith.mulf %58, %62 : vector<1x16x64xf32>
    %64 = arith.addf %57, %63 : vector<1x16x64xf32>
    %c0_50 = arith.constant 0 : index
    %c2_51 = arith.constant 2 : index
    %c8_52 = arith.constant 8 : index
    %65 = vector.load %arg8[%c0_50, %c2_51, %c8_52] : memref<1x18x128xf32, #tpu.memory_space<vmem>>, vector<1x16x64xf32>
    %c8_53 = arith.constant 8 : index
    %c0_54 = arith.constant 0 : index
    %66 = vector.load %arg2[%c8_53, %c0_54] : memref<9x64xf32, #tpu.memory_space<vmem>>, vector<1x64xf32>
    %67 = vector.shape_cast %66 : vector<1x64xf32> to vector<64xf32>
    %68 = vector.shape_cast %67 : vector<64xf32> to vector<1x1x64xf32>
    %69 = vector.broadcast %68 : vector<1x1x64xf32> to vector<1x16x64xf32>
    %70 = arith.mulf %65, %69 : vector<1x16x64xf32>
    %71 = arith.addf %64, %70 : vector<1x16x64xf32>
    %72 = vector.shape_cast %71 : vector<1x16x64xf32> to vector<16x64xf32>
    %c0_55 = arith.constant 0 : index
    %c0_56 = arith.constant 0 : index
    %73 = vector.load %arg3[%c0_55, %c0_56] : memref<64x128xf32, #tpu.memory_space<vmem>>, vector<64x128xf32>
    %cst_57 = arith.constant dense<0.000000e+00> : vector<16x128xf32>
    %74 = tpu.matmul %72, %73, %cst_57 {dimension_numbers = #tpu.dot_dimension_numbers<[1], [0], [0], [1], [0, 0, 1, 1], [], []>} : vector<16x64xf32>, vector<64x128xf32>, vector<16x128xf32> -> vector<16x128xf32>
    %c0_58 = arith.constant 0 : index
    %c0_59 = arith.constant 0 : index
    %75 = vector.load %arg4[%c0_58, %c0_59] : memref<1x128xf32, #tpu.memory_space<vmem>>, vector<1x128xf32>
    %76 = vector.broadcast %75 : vector<1x128xf32> to vector<16x128xf32>
    %77 = arith.addf %74, %76 : vector<16x128xf32>
    %cst_60 = arith.constant 0.000000e+00 : f32
    %78 = vector.broadcast %cst_60 : f32 to vector<16x128xf32>
    %79 = arith.cmpf ogt, %77, %78 : vector<16x128xf32>
    %cst_61 = arith.constant 0.00999999977 : f32
    %80 = vector.broadcast %cst_61 : f32 to vector<16x128xf32>
    %81 = arith.mulf %80, %77 : vector<16x128xf32>
    %82 = arith.select %79, %77, %81 : vector<16x128xi1>, vector<16x128xf32>
    %83 = vector.shape_cast %82 : vector<16x128xf32> to vector<1x16x128xf32>
    %c0_62 = arith.constant 0 : index
    %c1_63 = arith.constant 1 : index
    %c0_64 = arith.constant 0 : index
    %84 = vector.load %arg9[%c0_62, %c1_63, %c0_64] : memref<1x18x128xf32, #tpu.memory_space<vmem>>, vector<1x16x128xf32>
    tpu.vector_store %arg9[%c0_62, %c1_63, %c0_64], %83 {strides = array<i32>} : memref<1x18x128xf32, #tpu.memory_space<vmem>>, vector<1x16x128xf32>,
    %cst_65 = arith.constant 0.000000e+00 : f32
    %85 = vector.broadcast %cst_65 : f32 to vector<1x1x128xf32>
    %c0_66 = arith.constant 0 : index
    %c0_67 = arith.constant 0 : index
    %c0_68 = arith.constant 0 : index
    %86 = vector.load %arg9[%c0_66, %c0_67, %c0_68] : memref<1x18x128xf32, #tpu.memory_space<vmem>>, vector<1x1x128xf32>
    tpu.vector_store %arg9[%c0_66, %c0_67, %c0_68], %85 {strides = array<i32>} : memref<1x18x128xf32, #tpu.memory_space<vmem>>, vector<1x1x128xf32>,
    %cst_69 = arith.constant 0.000000e+00 : f32
    %87 = vector.broadcast %cst_69 : f32 to vector<1x1x128xf32>
    %c0_70 = arith.constant 0 : index
    %c17_71 = arith.constant 17 : index
    %c0_72 = arith.constant 0 : index
    %88 = vector.load %arg9[%c0_70, %c17_71, %c0_72] : memref<1x18x128xf32, #tpu.memory_space<vmem>>, vector<1x1x128xf32>
    tpu.vector_store %arg9[%c0_70, %c17_71, %c0_72], %87 {strides = array<i32>} : memref<1x18x128xf32, #tpu.memory_space<vmem>>, vector<1x1x128xf32>,
    %89 = tpu.iota {dimensions = array<i32: 1>} : vector<16x128xi32>
    %c8_i32 = arith.constant 8 : i32
    %90 = vector.broadcast %c8_i32 : i32 to vector<16x128xi32>
    %91 = arith.cmpi sge, %89, %90 : vector<16x128xi32>
    %c120_i32 = arith.constant 120 : i32
    %92 = vector.broadcast %c120_i32 : i32 to vector<16x128xi32>
    %93 = arith.cmpi slt, %89, %92 : vector<16x128xi32>
    %c0_73 = arith.constant 0 : index
    %c0_74 = arith.constant 0 : index
    %c0_75 = arith.constant 0 : index
    %94 = vector.load %arg9[%c0_73, %c0_74, %c0_75] : memref<1x18x128xf32, #tpu.memory_space<vmem>>, vector<1x16x128xf32>
    %95 = vector.shape_cast %94 : vector<1x16x128xf32> to vector<16x128xf32>
    %c8_i32_76 = arith.constant 8 : i32
    %96 = tpu.dynamic_rotate %95 by %c8_i32_76 dim 1 : vector<16x128xf32>, i32 -> vector<16x128xf32>
    %cst_77 = arith.constant 0.000000e+00 : f32
    %97 = vector.broadcast %cst_77 : f32 to vector<16x128xf32>
    %98 = arith.select %91, %96, %97 : vector<16x128xi1>, vector<16x128xf32>
    %c120_i32_78 = arith.constant 120 : i32
    %99 = tpu.dynamic_rotate %95 by %c120_i32_78 dim 1 : vector<16x128xf32>, i32 -> vector<16x128xf32>
    %cst_79 = arith.constant 0.000000e+00 : f32
    %100 = vector.broadcast %cst_79 : f32 to vector<16x128xf32>
    %101 = arith.select %93, %99, %100 : vector<16x128xi1>, vector<16x128xf32>
    %c0_80 = arith.constant 0 : index
    %c0_81 = arith.constant 0 : index
    %102 = vector.load %arg5[%c0_80, %c0_81] : memref<9x128xf32, #tpu.memory_space<vmem>>, vector<1x128xf32>
    %103 = vector.shape_cast %102 : vector<1x128xf32> to vector<128xf32>
    %104 = vector.shape_cast %103 : vector<128xf32> to vector<1x128xf32>
    %105 = vector.broadcast %104 : vector<1x128xf32> to vector<16x128xf32>
    %106 = arith.mulf %98, %105 : vector<16x128xf32>
    %c1_82 = arith.constant 1 : index
    %c0_83 = arith.constant 0 : index
    %107 = vector.load %arg5[%c1_82, %c0_83] : memref<9x128xf32, #tpu.memory_space<vmem>>, vector<1x128xf32>
    %108 = vector.shape_cast %107 : vector<1x128xf32> to vector<128xf32>
    %109 = vector.shape_cast %108 : vector<128xf32> to vector<1x128xf32>
    %110 = vector.broadcast %109 : vector<1x128xf32> to vector<16x128xf32>
    %111 = arith.mulf %95, %110 : vector<16x128xf32>
    %112 = arith.addf %106, %111 : vector<16x128xf32>
    %c2_84 = arith.constant 2 : index
    %c0_85 = arith.constant 0 : index
    %113 = vector.load %arg5[%c2_84, %c0_85] : memref<9x128xf32, #tpu.memory_space<vmem>>, vector<1x128xf32>
    %114 = vector.shape_cast %113 : vector<1x128xf32> to vector<128xf32>
    %115 = vector.shape_cast %114 : vector<128xf32> to vector<1x128xf32>
    %116 = vector.broadcast %115 : vector<1x128xf32> to vector<16x128xf32>
    %117 = arith.mulf %101, %116 : vector<16x128xf32>
    %118 = arith.addf %112, %117 : vector<16x128xf32>
    %c0_86 = arith.constant 0 : index
    %c1_87 = arith.constant 1 : index
    %c0_88 = arith.constant 0 : index
    %119 = vector.load %arg9[%c0_86, %c1_87, %c0_88] : memref<1x18x128xf32, #tpu.memory_space<vmem>>, vector<1x16x128xf32>
    %120 = vector.shape_cast %119 : vector<1x16x128xf32> to vector<16x128xf32>
    %c8_i32_89 = arith.constant 8 : i32
    %121 = tpu.dynamic_rotate %120 by %c8_i32_89 dim 1 : vector<16x128xf32>, i32 -> vector<16x128xf32>
    %cst_90 = arith.constant 0.000000e+00 : f32
    %122 = vector.broadcast %cst_90 : f32 to vector<16x128xf32>
    %123 = arith.select %91, %121, %122 : vector<16x128xi1>, vector<16x128xf32>
    %c120_i32_91 = arith.constant 120 : i32
    %124 = tpu.dynamic_rotate %120 by %c120_i32_91 dim 1 : vector<16x128xf32>, i32 -> vector<16x128xf32>
    %cst_92 = arith.constant 0.000000e+00 : f32
    %125 = vector.broadcast %cst_92 : f32 to vector<16x128xf32>
    %126 = arith.select %93, %124, %125 : vector<16x128xi1>, vector<16x128xf32>
    %c3_93 = arith.constant 3 : index
    %c0_94 = arith.constant 0 : index
    %127 = vector.load %arg5[%c3_93, %c0_94] : memref<9x128xf32, #tpu.memory_space<vmem>>, vector<1x128xf32>
    %128 = vector.shape_cast %127 : vector<1x128xf32> to vector<128xf32>
    %129 = vector.shape_cast %128 : vector<128xf32> to vector<1x128xf32>
    %130 = vector.broadcast %129 : vector<1x128xf32> to vector<16x128xf32>
    %131 = arith.mulf %123, %130 : vector<16x128xf32>
    %132 = arith.addf %118, %131 : vector<16x128xf32>
    %c4_95 = arith.constant 4 : index
    %c0_96 = arith.constant 0 : index
    %133 = vector.load %arg5[%c4_95, %c0_96] : memref<9x128xf32, #tpu.memory_space<vmem>>, vector<1x128xf32>
    %134 = vector.shape_cast %133 : vector<1x128xf32> to vector<128xf32>
    %135 = vector.shape_cast %134 : vector<128xf32> to vector<1x128xf32>
    %136 = vector.broadcast %135 : vector<1x128xf32> to vector<16x128xf32>
    %137 = arith.mulf %120, %136 : vector<16x128xf32>
    %138 = arith.addf %132, %137 : vector<16x128xf32>
    %c5_97 = arith.constant 5 : index
    %c0_98 = arith.constant 0 : index
    %139 = vector.load %arg5[%c5_97, %c0_98] : memref<9x128xf32, #tpu.memory_space<vmem>>, vector<1x128xf32>
    %140 = vector.shape_cast %139 : vector<1x128xf32> to vector<128xf32>
    %141 = vector.shape_cast %140 : vector<128xf32> to vector<1x128xf32>
    %142 = vector.broadcast %141 : vector<1x128xf32> to vector<16x128xf32>
    %143 = arith.mulf %126, %142 : vector<16x128xf32>
    %144 = arith.addf %138, %143 : vector<16x128xf32>
    %c0_99 = arith.constant 0 : index
    %c2_100 = arith.constant 2 : index
    %c0_101 = arith.constant 0 : index
    %145 = vector.load %arg9[%c0_99, %c2_100, %c0_101] : memref<1x18x128xf32, #tpu.memory_space<vmem>>, vector<1x16x128xf32>
    %146 = vector.shape_cast %145 : vector<1x16x128xf32> to vector<16x128xf32>
    %c8_i32_102 = arith.constant 8 : i32
    %147 = tpu.dynamic_rotate %146 by %c8_i32_102 dim 1 : vector<16x128xf32>, i32 -> vector<16x128xf32>
    %cst_103 = arith.constant 0.000000e+00 : f32
    %148 = vector.broadcast %cst_103 : f32 to vector<16x128xf32>
    %149 = arith.select %91, %147, %148 : vector<16x128xi1>, vector<16x128xf32>
    %c120_i32_104 = arith.constant 120 : i32
    %150 = tpu.dynamic_rotate %146 by %c120_i32_104 dim 1 : vector<16x128xf32>, i32 -> vector<16x128xf32>
    %cst_105 = arith.constant 0.000000e+00 : f32
    %151 = vector.broadcast %cst_105 : f32 to vector<16x128xf32>
    %152 = arith.select %93, %150, %151 : vector<16x128xi1>, vector<16x128xf32>
    %c6_106 = arith.constant 6 : index
    %c0_107 = arith.constant 0 : index
    %153 = vector.load %arg5[%c6_106, %c0_107] : memref<9x128xf32, #tpu.memory_space<vmem>>, vector<1x128xf32>
    %154 = vector.shape_cast %153 : vector<1x128xf32> to vector<128xf32>
    %155 = vector.shape_cast %154 : vector<128xf32> to vector<1x128xf32>
    %156 = vector.broadcast %155 : vector<1x128xf32> to vector<16x128xf32>
    %157 = arith.mulf %149, %156 : vector<16x128xf32>
    %158 = arith.addf %144, %157 : vector<16x128xf32>
    %c7_108 = arith.constant 7 : index
    %c0_109 = arith.constant 0 : index
    %159 = vector.load %arg5[%c7_108, %c0_109] : memref<9x128xf32, #tpu.memory_space<vmem>>, vector<1x128xf32>
    %160 = vector.shape_cast %159 : vector<1x128xf32> to vector<128xf32>
    %161 = vector.shape_cast %160 : vector<128xf32> to vector<1x128xf32>
    %162 = vector.broadcast %161 : vector<1x128xf32> to vector<16x128xf32>
    %163 = arith.mulf %146, %162 : vector<16x128xf32>
    %164 = arith.addf %158, %163 : vector<16x128xf32>
    %c8_110 = arith.constant 8 : index
    %c0_111 = arith.constant 0 : index
    %165 = vector.load %arg5[%c8_110, %c0_111] : memref<9x128xf32, #tpu.memory_space<vmem>>, vector<1x128xf32>
    %166 = vector.shape_cast %165 : vector<1x128xf32> to vector<128xf32>
    %167 = vector.shape_cast %166 : vector<128xf32> to vector<1x128xf32>
    %168 = vector.broadcast %167 : vector<1x128xf32> to vector<16x128xf32>
    %169 = arith.mulf %152, %168 : vector<16x128xf32>
    %170 = arith.addf %164, %169 : vector<16x128xf32>
    %c0_112 = arith.constant 0 : index
    %c0_113 = arith.constant 0 : index
    %171 = vector.load %arg6[%c0_112, %c0_113] : memref<1x128xf32, #tpu.memory_space<vmem>>, vector<1x128xf32>
    %172 = vector.broadcast %171 : vector<1x128xf32> to vector<16x128xf32>
    %173 = arith.addf %170, %172 : vector<16x128xf32>
    %cst_114 = arith.constant 0.000000e+00 : f32
    %174 = vector.broadcast %cst_114 : f32 to vector<16x128xf32>
    %175 = arith.cmpf ogt, %173, %174 : vector<16x128xf32>
    %cst_115 = arith.constant 0.00999999977 : f32
    %176 = vector.broadcast %cst_115 : f32 to vector<16x128xf32>
    %177 = arith.mulf %176, %173 : vector<16x128xf32>
    %178 = arith.select %175, %173, %177 : vector<16x128xi1>, vector<16x128xf32>
    %179 = vector.shape_cast %178 : vector<16x128xf32> to vector<1x16x128xf32>
    %c0_116 = arith.constant 0 : index
    %c0_117 = arith.constant 0 : index
    %c0_118 = arith.constant 0 : index
    %180 = vector.load %arg7[%c0_116, %c0_117, %c0_118] : memref<1x16x128xf32, #tpu.memory_space<vmem>>, vector<1x16x128xf32>
    tpu.vector_store %arg7[%c0_116, %c0_117, %c0_118], %179 {strides = array<i32>} : memref<1x16x128xf32, #tpu.memory_space<vmem>>, vector<1x16x128xf32>,
    return
  }
  func.func @transform_0(%arg0: i32) -> (i32, i32, i32) {
    %c0_i32 = arith.constant 0 : i32
    %c0_i32_0 = arith.constant 0 : i32
    %c0_i32_1 = arith.constant 0 : i32
    return %arg0, %c0_i32, %c0_i32_0 : i32, i32, i32
  }
  func.func @transform_1(%arg0: i32) -> (i32, i32) {
    %c0_i32 = arith.constant 0 : i32
    %c0_i32_0 = arith.constant 0 : i32
    %c0_i32_1 = arith.constant 0 : i32
    return %c0_i32, %c0_i32_0 : i32, i32
  }
  func.func @transform_2(%arg0: i32) -> (i32, i32) {
    %c0_i32 = arith.constant 0 : i32
    %c0_i32_0 = arith.constant 0 : i32
    %c0_i32_1 = arith.constant 0 : i32
    return %c0_i32, %c0_i32_0 : i32, i32
  }
  func.func @transform_3(%arg0: i32) -> (i32, i32) {
    %c0_i32 = arith.constant 0 : i32
    %c0_i32_0 = arith.constant 0 : i32
    %c0_i32_1 = arith.constant 0 : i32
    return %c0_i32, %c0_i32_0 : i32, i32
  }
  func.func @transform_4(%arg0: i32) -> (i32, i32) {
    %c0_i32 = arith.constant 0 : i32
    %c0_i32_0 = arith.constant 0 : i32
    %c0_i32_1 = arith.constant 0 : i32
    return %c0_i32, %c0_i32_0 : i32, i32
  }
  func.func @transform_5(%arg0: i32) -> (i32, i32) {
    %c0_i32 = arith.constant 0 : i32
    %c0_i32_0 = arith.constant 0 : i32
    %c0_i32_1 = arith.constant 0 : i32
    return %c0_i32, %c0_i32_0 : i32, i32
  }
  func.func @transform_6(%arg0: i32) -> (i32, i32, i32) {
    %c0_i32 = arith.constant 0 : i32
    %c0_i32_0 = arith.constant 0 : i32
    %c0_i32_1 = arith.constant 0 : i32
    return %arg0, %c0_i32, %c0_i32_0 : i32, i32, i32
  }
}

</mosaic_0001>

<llo_original>
// kernel: tpu_custom_call.1
$region0: #{tpu_custom_call.1}
  #allocation0 [shape = 'u32[]', space=smem, size = 0x4, offset = 0x4, fixed_abs, tag = 'smem constant byte address 0x4 - core index']
  #allocation1 [shape = 'u32[144,128]{1,0:T(1,128)}', space=vmem, size = 0x12000, scoped, tag = 'internal scratch']
  #allocation2 [shape = 'f32[1,18,128]{2,1,0:T(8,128)}', space=vmem, size = 0x3000, scoped, tag = 'scratch operand']
  #allocation3 [shape = 'f32[1,18,128]{2,1,0:T(8,128)}', space=vmem, size = 0x3000, scoped, tag = 'scratch operand']
  %s0 = inlined_call_operand.hbm [shape: f32[2,16,64], index: 0, kind: input, shape index: {}]
  %s1 = inlined_call_operand.hbm [shape: f32[9,64], index: 1, kind: input, shape index: {}]
  %s2 = inlined_call_operand.hbm [shape: f32[64,128], index: 2, kind: input, shape index: {}]
  %s3 = inlined_call_operand.vmem [shape: f32[1,128], index: 3, kind: input, shape index: {}]
  %s4 = inlined_call_operand.hbm [shape: f32[9,128], index: 4, kind: input, shape index: {}]
  %s5 = inlined_call_operand.vmem [shape: f32[1,128], index: 5, kind: input, shape index: {}]
  %s6 = inlined_call_operand.hbm [shape: f32[2,16,128], index: 6, kind: output, shape index: {}]
  %s7 = sld [smem:[#allocation0]]
  $region73: #{tpu_custom_call.1} parent=0
    _
  %s9 = ssub.s32 1, %s7
  %s10 = scalar_select 0, %s9, %s7
  $region1: #{tpu_custom_call.1} parent=0
    #allocation4 [shape = 'u8[16384]{0}', space=vmem, size = 0x4000, scoped, tag = 'input window, operand 0']
    #allocation5 [shape = 's32[2]{0}', space=sflag, size = 0x8, scoped, tag = 'scoped memory for tpu_custom_call.1']
    #allocation6 [shape = 's32[2]{0}', space=sflag, size = 0x8, scoped, tag = 'scoped memory for tpu_custom_call.1']
    #allocation7 [shape = 'u8[8192]{0}', space=vmem, size = 0x2000, scoped, tag = 'input window, operand 1, single buffered']
    #allocation8 [shape = 's32[1]{0}', space=sflag, size = 0x4, scoped, tag = 'scoped memory for tpu_custom_call.1']
    #allocation9 [shape = 'u8[32768]{0}', space=vmem, size = 0x8000, scoped, tag = 'input window, operand 2, single buffered']
    #allocation10 [shape = 'u8[8192]{0}', space=vmem, size = 0x2000, scoped, tag = 'input window, operand 4, single buffered']
    #allocation11 [shape = 's32[1]{0}', space=sflag, size = 0x4, scoped, tag = 'scoped memory for tpu_custom_call.1']
    #allocation12 [shape = 'u8[16384]{0}', space=vmem, size = 0x4000, scoped, tag = 'output window, operand 0']
    %11 = vsyncpa [#allocation5], 0
    %s12 = scalar_lea.sflag [#allocation5], 1
    %13 = vsyncpa %s12, 0
    %14 = vsyncpa [#allocation8], 0
    %15 = vsyncpa [#allocation11], 0
    %16 = vsyncpa [#allocation6], 0
    %s17 = scalar_lea.sflag [#allocation6], 1
    %18 = vsyncpa %s17, 0
    loop: start=0, step=1, limit=4
    $region2: #{tpu_custom_call.1} parent=1 // loop_pre_header
      _
    $region3: #{tpu_custom_call.1} parent=1 // loop_header
      %s20 = sphi 0, %s24
      %p21 = scmp.ge.s32.totalorder %s20, 4
      %s30 = sphi 0, %s32
      %s33 = sphi 0, %s30
      %s34 = sphi 0, %s33
      %s50 = sphi 0, %s34
      %s54 = sphi 0, %s54
      %s56 = sphi 0, %s54
      %s57 = sphi 0, %s56
      %s71 = sphi 0, %s57
      %s75 = sphi 0, %s75
      %s77 = sphi 0, %s75
      %s78 = sphi 0, %s77
      %s92 = sphi 0, %s78
      %s96 = sphi 0, %s96
      %s98 = sphi 0, %s96
      %s99 = sphi 0, %s98
      %s113 = sphi 0, %s99
      %s117 = sphi 0, %s117
      %s119 = sphi 0, %s117
      %s120 = sphi 0, %s119
      %s134 = sphi 0, %s120
      %s138 = sphi 0, %s138
      %s140 = sphi 0, %s138
      %s141 = sphi 0, %s140
      %s155 = sphi 0, %s141
      %s161 = sphi 0, %s163
      %s164 = sphi 0, %s161
      %s165 = sphi 0, %s164
      %s181 = sphi 0, %s165
    $region4: #{tpu_custom_call.1} parent=1 // loop_header_branch
      %23 = sbr.rel (%p21) target = $region8
    $region5: #{tpu_custom_call.1} parent=1 // loop_body
      %s25 = ssub.s32 %s20, 1
      %s26 = ssub.s32 %s20, 2
      %s27 = sadd.s32 %s20, 1
      %s28 = ssub.s32 %s20, %s27
      %p29 = scmp.eq.s32.totalorder %s28, 0
      %s31 = sadd.s32 %s30, 1
      %s32 = scalar_select %p29, %s30, %s31
      %p35 = pneg %p29
      %p36 = scmp.eq.s32.totalorder %s20, 1
      %p37 = por %p35, %p36
      %p38 = scmp.ne.s32.totalorder %s30, %s33
      %p39 = scmp.eq.s32.totalorder %s20, 0
      %p40 = por %p38, %p39
      %p41 = scmp.ne.s32.totalorder %s30, %s33
      %p42 = scmp.eq.s32.totalorder %s25, 1
      %p43 = por %p41, %p42
      %p44 = scmp.ne.s32.totalorder %s33, %s34
      %p45 = scmp.eq.s32.totalorder %s25, 0
      %p46 = por %p44, %p45
      %p47 = scmp.ne.s32.totalorder %s33, %s34
      %p48 = scmp.eq.s32.totalorder %s26, 1
      %p49 = por %p47, %p48
      %p51 = scmp.ne.s32.totalorder %s34, %s50
      %p52 = scmp.eq.s32.totalorder %s26, 0
      %p53 = por %p51, %p52
      %s55 = sadd.s32 %s54, 1
      %p58 = scmp.eq.s32.totalorder %s20, 1
      %p59 = scmp.ne.s32.totalorder %s54, %s56
      %p60 = scmp.eq.s32.totalorder %s20, 0
      %p61 = por %p59, %p60
      %p62 = scmp.ne.s32.totalorder %s54, %s56
      %p63 = scmp.eq.s32.totalorder %s25, 1
      %p64 = por %p62, %p63
      %p65 = scmp.ne.s32.totalorder %s56, %s57
      %p66 = scmp.eq.s32.totalorder %s25, 0
      %p67 = por %p65, %p66
      %p68 = scmp.ne.s32.totalorder %s56, %s57
      %p69 = scmp.eq.s32.totalorder %s26, 1
      %p70 = por %p68, %p69
      %p72 = scmp.ne.s32.totalorder %s57, %s71
      %p73 = scmp.eq.s32.totalorder %s26, 0
      %p74 = por %p72, %p73
      %s76 = sadd.s32 %s75, 1
      %p79 = scmp.eq.s32.totalorder %s20, 1
      %p80 = scmp.ne.s32.totalorder %s75, %s77
      %p81 = scmp.eq.s32.totalorder %s20, 0
      %p82 = por %p80, %p81
      %p83 = scmp.ne.s32.totalorder %s75, %s77
      %p84 = scmp.eq.s32.totalorder %s25, 1
      %p85 = por %p83, %p84
      %p86 = scmp.ne.s32.totalorder %s77, %s78
      %p87 = scmp.eq.s32.totalorder %s25, 0
      %p88 = por %p86, %p87
      %p89 = scmp.ne.s32.totalorder %s77, %s78
      %p90 = scmp.eq.s32.totalorder %s26, 1
      %p91 = por %p89, %p90
      %p93 = scmp.ne.s32.totalorder %s78, %s92
      %p94 = scmp.eq.s32.totalorder %s26, 0
      %p95 = por %p93, %p94
      %s97 = sadd.s32 %s96, 1
      %p100 = scmp.eq.s32.totalorder %s20, 1
      %p101 = scmp.ne.s32.totalorder %s96, %s98
      %p102 = scmp.eq.s32.totalorder %s20, 0
      %p103 = por %p101, %p102
      %p104 = scmp.ne.s32.totalorder %s96, %s98
      %p105 = scmp.eq.s32.totalorder %s25, 1
      %p106 = por %p104, %p105
      %p107 = scmp.ne.s32.totalorder %s98, %s99
      %p108 = scmp.eq.s32.totalorder %s25, 0
      %p109 = por %p107, %p108
      %p110 = scmp.ne.s32.totalorder %s98, %s99
      %p111 = scmp.eq.s32.totalorder %s26, 1
      %p112 = por %p110, %p111
      %p114 = scmp.ne.s32.totalorder %s99, %s113
      %p115 = scmp.eq.s32.totalorder %s26, 0
      %p116 = por %p114, %p115
      %s118 = sadd.s32 %s117, 1
      %p121 = scmp.eq.s32.totalorder %s20, 1
      %p122 = scmp.ne.s32.totalorder %s117, %s119
      %p123 = scmp.eq.s32.totalorder %s20, 0
      %p124 = por %p122, %p123
      %p125 = scmp.ne.s32.totalorder %s117, %s119
      %p126 = scmp.eq.s32.totalorder %s25, 1
      %p127 = por %p125, %p126
      %p128 = scmp.ne.s32.totalorder %s119, %s120
      %p129 = scmp.eq.s32.totalorder %s25, 0
      %p130 = por %p128, %p129
      %p131 = scmp.ne.s32.totalorder %s119, %s120
      %p132 = scmp.eq.s32.totalorder %s26, 1
      %p133 = por %p131, %p132
      %p135 = scmp.ne.s32.totalorder %s120, %s134
      %p136 = scmp.eq.s32.totalorder %s26, 0
      %p137 = por %p135, %p136
      %s139 = sadd.s32 %s138, 1
      %p142 = scmp.eq.s32.totalorder %s20, 1
      %p143 = scmp.ne.s32.totalorder %s138, %s140
      %p144 = scmp.eq.s32.totalorder %s20, 0
      %p145 = por %p143, %p144
      %p146 = scmp.ne.s32.totalorder %s138, %s140
      %p147 = scmp.eq.s32.totalorder %s25, 1
      %p148 = por %p146, %p147
      %p149 = scmp.ne.s32.totalorder %s140, %s141
      %p150 = scmp.eq.s32.totalorder %s25, 0
      %p151 = por %p149, %p150
      %p152 = scmp.ne.s32.totalorder %s140, %s141
      %p153 = scmp.eq.s32.totalorder %s26, 1
      %p154 = por %p152, %p153
      %p156 = scmp.ne.s32.totalorder %s141, %s155
      %p157 = scmp.eq.s32.totalorder %s26, 0
      %p158 = por %p156, %p157
      %s159 = ssub.s32 %s20, %s27
      %p160 = scmp.eq.s32.totalorder %s159, 0
      %s162 = sadd.s32 %s161, 1
      %s163 = scalar_select %p160, %s161, %s162
      %p166 = pneg %p160
      %p167 = scmp.eq.s32.totalorder %s20, 1
      %p168 = por %p166, %p167
      %p169 = scmp.ne.s32.totalorder %s161, %s164
      %p170 = scmp.eq.s32.totalorder %s20, 0
      %p171 = por %p169, %p170
      %p172 = scmp.ne.s32.totalorder %s161, %s164
      %p173 = scmp.eq.s32.totalorder %s25, 1
      %p174 = por %p172, %p173
      %p175 = scmp.ne.s32.totalorder %s164, %s165
      %p176 = scmp.eq.s32.totalorder %s25, 0
      %p177 = por %p175, %p176
      %p178 = scmp.ne.s32.totalorder %s164, %s165
      %p179 = scmp.eq.s32.totalorder %s26, 1
      %p180 = por %p178, %p179
      %p182 = scmp.ne.s32.totalorder %s165, %s181
      %p183 = scmp.eq.s32.totalorder %s26, 0
      %p184 = por %p182, %p183
      %p185 = scmp.le.s32.totalorder 1, %s20
      %p186 = scmp.lt.s32.totalorder %s20, 3
      %p187 = pnand %p185, %p186
      %p188 = pneg %p187
      // Predicated region
      $region9: #{tpu_custom_call.1} parent=5 // pred_check
        _
      $region10: #{tpu_custom_call.1} parent=5 // pred_check_branch
        %190 = sbr.rel (%p187) target = $region12
      $region11: #{tpu_custom_call.1} parent=5 // pred_region
        %s191 = ssub.s32 %s20, 1
        // Predicated region
        $region13: #{tpu_custom_call.1} parent=11 // pred_check
          %p192 = pneg %p67
        $region14: #{tpu_custom_call.1} parent=11 // pred_check_branch
          %194 = sbr.rel (%p192) target = $region16
        $region15: #{tpu_custom_call.1} parent=11 // pred_region
          %s196 = ssub.s32 256, 256
          %197 = vsyncadd [#allocation8], %s196
          %s198 = sshll.u32 [#allocation7], 4
          %s199 = int_to_ptr.vmem [resolvable:$true] %s198
          %204 = dma.hbm_to_vmem [thread:$0]  %s1, 256, %s199, [#allocation8], 128, 128, 8
        $region16: #{tpu_custom_call.1} parent=11 // pred_fallthru
          _
        // Predicated region
        $region17: #{tpu_custom_call.1} parent=11 // pred_check
          %p205 = pneg %p88
        $region18: #{tpu_custom_call.1} parent=11 // pred_check_branch
          %207 = sbr.rel (%p205) target = $region20
        $region19: #{tpu_custom_call.1} parent=11 // pred_region
          %s209 = ssub.s32 1024, 1024
          %210 = vsyncadd [#allocation8], %s209
          %s211 = sshll.u32 [#allocation9], 4
          %s212 = int_to_ptr.vmem [resolvable:$true] %s211
          %217 = dma.hbm_to_vmem [thread:$0]  %s2, 1024, %s212, [#allocation8], 128, 128, 8
        $region20: #{tpu_custom_call.1} parent=11 // pred_fallthru
          _
        // Predicated region
        $region21: #{tpu_custom_call.1} parent=11 // pred_check
          %p218 = pneg %p109
        $region22: #{tpu_custom_call.1} parent=11 // pred_check_branch
          %220 = sbr.rel (%p218) target = $region24
        $region23: #{tpu_custom_call.1} parent=11 // pred_region
          _
        $region24: #{tpu_custom_call.1} parent=11 // pred_fallthru
          _
        // Predicated region
        $region25: #{tpu_custom_call.1} parent=11 // pred_check
          %p221 = pneg %p130
        $region26: #{tpu_custom_call.1} parent=11 // pred_check_branch
          %223 = sbr.rel (%p221) target = $region28
        $region27: #{tpu_custom_call.1} parent=11 // pred_region
          %s225 = ssub.s32 256, 256
          %226 = vsyncadd [#allocation11], %s225
          %s227 = sshll.u32 [#allocation10], 4
          %s228 = int_to_ptr.vmem [resolvable:$true] %s227
          %233 = dma.hbm_to_vmem [thread:$0]  %s4, 256, %s228, [#allocation11], 128, 128, 8
        $region28: #{tpu_custom_call.1} parent=11 // pred_fallthru
          _
        // Predicated region
        $region29: #{tpu_custom_call.1} parent=11 // pred_check
          %p234 = pneg %p151
        $region30: #{tpu_custom_call.1} parent=11 // pred_check_branch
          %236 = sbr.rel (%p234) target = $region32
        $region31: #{tpu_custom_call.1} parent=11 // pred_region
          _
        $region32: #{tpu_custom_call.1} parent=11 // pred_fallthru
          _
      $region12: #{tpu_custom_call.1} parent=5 // pred_fallthru
        _
      %p237 = scmp.lt.s32.totalorder %s20, 2
      // Predicated region
      $region33: #{tpu_custom_call.1} parent=5 // pred_check
        %p238 = pneg %p237
      $region34: #{tpu_custom_call.1} parent=5 // pred_check_branch
        %240 = sbr.rel (%p238) target = $region36
      $region35: #{tpu_custom_call.1} parent=5 // pred_region
        // Predicated region
        $region37: #{tpu_custom_call.1} parent=35 // pred_check
          %p241 = pneg %p40
        $region38: #{tpu_custom_call.1} parent=35 // pred_check_branch
          %243 = sbr.rel (%p241) target = $region40
        $region39: #{tpu_custom_call.1} parent=35 // pred_region
          %s244 = sand.u32 %s30, 1
          %s245 = scalar_lea.sflag [#allocation5], %s244
          %s246 = sand.u32 %s30, 1
          %s247 = smul.addr %s246, 16
          %s248 = scalar_lea.vmem [#allocation4], %s247
          %s250 = ssub.s32 256, 256
          %251 = vsyncadd %s245, %s250
          %s252 = smul.addr %s20, 2
          %s253 = smul.addr %s252, 128
          %s254 = scalar_lea.hbm %s0, %s253
          %s255 = sshll.u32 %s248, 4
          %s256 = int_to_ptr.vmem [resolvable:$true] %s255
          %261 = dma.hbm_to_vmem [thread:$0]  %s254, 256, %s256, %s245, 128, 128, 8
        $region40: #{tpu_custom_call.1} parent=35 // pred_fallthru
          _
      $region36: #{tpu_custom_call.1} parent=5 // pred_fallthru
        _
      %p262 = scmp.le.s32.totalorder 1, %s20
      %p263 = scmp.lt.s32.totalorder %s20, 3
      %p264 = pnand %p262, %p263
      %p265 = pneg %p264
      // Predicated region
      $region41: #{tpu_custom_call.1} parent=5 // pred_check
        _
      $region42: #{tpu_custom_call.1} parent=5 // pred_check_branch
        %267 = sbr.rel (%p264) target = $region44
      $region43: #{tpu_custom_call.1} parent=5 // pred_region
        %s268 = ssub.s32 %s20, 1
        %s269 = sand.u32 %s33, 1
        %s270 = scalar_lea.sflag [#allocation5], %s269
        %s271 = sand.u32 %s33, 1
        %s272 = smul.addr %s271, 16
        %s273 = scalar_lea.vmem [#allocation4], %s272
        // Predicated region
        $region45: #{tpu_custom_call.1} parent=43 // pred_check
          %p274 = pneg %p46
        $region46: #{tpu_custom_call.1} parent=43 // pred_check_branch
          %276 = sbr.rel (%p274) target = $region48
        $region47: #{tpu_custom_call.1} parent=43 // pred_region
          %277 = dma.done %s270, 256
        $region48: #{tpu_custom_call.1} parent=43 // pred_fallthru
          _
        // Predicated region
        $region49: #{tpu_custom_call.1} parent=43 // pred_check
          %p278 = pneg %p67
        $region50: #{tpu_custom_call.1} parent=43 // pred_check_branch
          %280 = sbr.rel (%p278) target = $region52
        $region51: #{tpu_custom_call.1} parent=43 // pred_region
          %281 = dma.done [#allocation8], 256
        $region52: #{tpu_custom_call.1} parent=43 // pred_fallthru
          _
        // Predicated region
        $region53: #{tpu_custom_call.1} parent=43 // pred_check
          %p282 = pneg %p88
        $region54: #{tpu_custom_call.1} parent=43 // pred_check_branch
          %284 = sbr.rel (%p282) target = $region56
        $region55: #{tpu_custom_call.1} parent=43 // pred_region
          %285 = dma.done [#allocation8], 1024
        $region56: #{tpu_custom_call.1} parent=43 // pred_fallthru
          _
        // Predicated region
        $region57: #{tpu_custom_call.1} parent=43 // pred_check
          %p286 = pneg %p130
        $region58: #{tpu_custom_call.1} parent=43 // pred_check_branch
          %288 = sbr.rel (%p286) target = $region60
        $region59: #{tpu_custom_call.1} parent=43 // pred_region
          %289 = dma.done [#allocation11], 256
        $region60: #{tpu_custom_call.1} parent=43 // pred_fallthru
          _
        %s290 = sand.u32 %s33, 1
        %s291 = scalar_lea.sflag [#allocation5], %s290
        %s292 = sand.u32 %s33, 1
        %s293 = smul.addr %s292, 16
        %s294 = scalar_lea.vmem [#allocation4], %s293
        %p295 = pneg %p46
        %p296 = pneg %p43
        %p297 = pneg %p67
        %p298 = pneg %p64
        %p299 = pneg %p88
        %p300 = pneg %p85
        %p301 = pneg %p109
        %p302 = pneg %p106
        %p303 = pneg %p130
        %p304 = pneg %p127
        %p305 = pneg %p151
        %p306 = pneg %p148
        %p307 = pneg %p177
        %p308 = pneg %p174
        %s309 = sand.u32 %s164, 1
        %s310 = scalar_lea.sflag [#allocation6], %s309
        %s311 = sand.u32 %s164, 1
        %s312 = smul.addr %s311, 16
        %s313 = scalar_lea.vmem [#allocation12], %s312
        %314 = vst [vmem:[#allocation2] sm:$0x1] 0.0
        %315 = vst [vmem:[#allocation2 + $0x11] sm:$0x1] 0.0
        %vm316 = vcmask 31744
        %317 = vst.msk [vmem:[#allocation2] sm:$0xff] %vm316, 0.0
        %318 = vst.msk [vmem:[#allocation2 + $0x8] sm:$0xff] %vm316, 0.0
        %vm319 = vcmask 25600
        %320 = vst.msk [vmem:[#allocation2 + $0x10] sm:$0x3] %vm319, 0.0
        %vm321 = vcmask 589344
        %322 = vst.msk [vmem:[#allocation2] sm:$0xff] %vm321, 0.0
        %323 = vst.msk [vmem:[#allocation2 + $0x8] sm:$0xff] %vm321, 0.0
        %vm324 = vcmask 583200
        %325 = vst.msk [vmem:[#allocation2 + $0x10] sm:$0x3] %vm324, 0.0
        %v326 = vld [vmem:[%s273] sm:$0xff]
        %v327 = vld [vmem:[%s273 + $0x8] sm:$0xff]
        %330 = vrot.lane.b32.xlu0 %v326, 4
        %v331 = vpop.permute.xlu0 %330
        %332 = vrot.lane.b32.xlu0 %v327, 4
        %v333 = vpop.permute.xlu0 %332
        %vm336 = vcmask 556064
        %337 = vst.msk [vmem:[#allocation2 + $0x1] sm:$0xff] %vm336, %v331
        %338 = vst.msk [vmem:[#allocation2 + $0x9] sm:$0xff] %vm336, %v333
        %v339 = vld [vmem:[#allocation2] sm:$0xff]
        %v340 = vld [vmem:[#allocation2 + $0x8] sm:$0xff]
        %v341 = vld [vmem:[#allocation7] sm:$0x1]
        %v342 = vlaneseq
        %v343 = vshrl.u32 %v342, 7
        %v344 = vsub.s32 0, %v343
        %v345 = vrot.slane %v341, %v344
        %v346 = vmul.f32 %v339, %v345
        %v347 = vmul.f32 %v340, %v345
        %v348 = vld [vmem:[#allocation7 + $0x1] sm:$0x1]
        %v349 = vlaneseq
        %v350 = vshrl.u32 %v349, 7
        %v351 = vsub.s32 0, %v350
        %v352 = vrot.slane %v348, %v351
        %354 = vrot.lane.b32.xlu0 %v352, 4
        %v355 = vpop.permute.xlu0 %354
        %v357 = vmul.f32 %v339, %v355
        %v358 = vmul.f32 %v340, %v355
        %361 = vrot.lane.b32.xlu0 %v357, 124
        %v362 = vpop.permute.xlu0 %361
        %363 = vrot.lane.b32.xlu0 %v358, 124
        %v364 = vpop.permute.xlu0 %363
        %v367 = vadd.f32 %v346, %v362
        %v368 = vadd.f32 %v347, %v364
        %v369 = vld [vmem:[#allocation7 + $0x2] sm:$0x1]
        %v370 = vlaneseq
        %v371 = vshrl.u32 %v370, 7
        %v372 = vsub.s32 0, %v371
        %v373 = vrot.slane %v369, %v372
        %375 = vrot.lane.b32.xlu0 %v373, 8
        %v376 = vpop.permute.xlu0 %375
        %v378 = vmul.f32 %v339, %v376
        %v379 = vmul.f32 %v340, %v376
        %382 = vrot.lane.b32.xlu0 %v378, 120
        %v383 = vpop.permute.xlu0 %382
        %384 = vrot.lane.b32.xlu0 %v379, 120
        %v385 = vpop.permute.xlu0 %384
        %v388 = vadd.f32 %v367, %v383
        %v389 = vadd.f32 %v368, %v385
        %v390 = vld [vmem:[#allocation2 + $0x1] sm:$0xff]
        %v391 = vld [vmem:[#allocation2 + $0x9] sm:$0xff]
        %v392 = vld [vmem:[#allocation7 + $0x3] sm:$0x1]
        %v393 = vlaneseq
        %v394 = vshrl.u32 %v393, 7
        %v395 = vsub.s32 0, %v394
        %v396 = vrot.slane %v392, %v395
        %v397 = vmul.f32 %v390, %v396
        %v398 = vmul.f32 %v391, %v396
        %v399 = vadd.f32 %v388, %v397
        %v400 = vadd.f32 %v389, %v398
        %v401 = vld [vmem:[#allocation7 + $0x4] sm:$0x1]
        %v402 = vlaneseq
        %v403 = vshrl.u32 %v402, 7
        %v404 = vsub.s32 0, %v403
        %v405 = vrot.slane %v401, %v404
        %407 = vrot.lane.b32.xlu0 %v405, 4
        %v408 = vpop.permute.xlu0 %407
        %v410 = vmul.f32 %v390, %v408
        %v411 = vmul.f32 %v391, %v408
        %414 = vrot.lane.b32.xlu0 %v410, 124
        %v415 = vpop.permute.xlu0 %414
        %416 = vrot.lane.b32.xlu0 %v411, 124
        %v417 = vpop.permute.xlu0 %416
        %v420 = vadd.f32 %v399, %v415
        %v421 = vadd.f32 %v400, %v417
        %v422 = vld [vmem:[#allocation7 + $0x5] sm:$0x1]
        %v423 = vlaneseq
        %v424 = vshrl.u32 %v423, 7
        %v425 = vsub.s32 0, %v424
        %v426 = vrot.slane %v422, %v425
        %428 = vrot.lane.b32.xlu0 %v426, 8
        %v429 = vpop.permute.xlu0 %428
        %v431 = vmul.f32 %v390, %v429
        %v432 = vmul.f32 %v391, %v429
        %435 = vrot.lane.b32.xlu0 %v431, 120
        %v436 = vpop.permute.xlu0 %435
        %437 = vrot.lane.b32.xlu0 %v432, 120
        %v438 = vpop.permute.xlu0 %437
        %v441 = vadd.f32 %v420, %v436
        %v442 = vadd.f32 %v421, %v438
        %v443 = vld [vmem:[#allocation2 + $0x2] sm:$0xff]
        %v444 = vld [vmem:[#allocation2 + $0xa] sm:$0xff]
        %v445 = vld [vmem:[#allocation7 + $0x6] sm:$0x1]
        %v446 = vlaneseq
        %v447 = vshrl.u32 %v446, 7
        %v448 = vsub.s32 0, %v447
        %v449 = vrot.slane %v445, %v448
        %v450 = vmul.f32 %v443, %v449
        %v451 = vmul.f32 %v444, %v449
        %v452 = vadd.f32 %v441, %v450
        %v453 = vadd.f32 %v442, %v451
        %v454 = vld [vmem:[#allocation7 + $0x7] sm:$0x1]
        %v455 = vlaneseq
        %v456 = vshrl.u32 %v455, 7
        %v457 = vsub.s32 0, %v456
        %v458 = vrot.slane %v454, %v457
        %460 = vrot.lane.b32.xlu0 %v458, 4
        %v461 = vpop.permute.xlu0 %460
        %v463 = vmul.f32 %v443, %v461
        %v464 = vmul.f32 %v444, %v461
        %467 = vrot.lane.b32.xlu0 %v463, 124
        %v468 = vpop.permute.xlu0 %467
        %469 = vrot.lane.b32.xlu0 %v464, 124
        %v470 = vpop.permute.xlu0 %469
        %v473 = vadd.f32 %v452, %v468
        %v474 = vadd.f32 %v453, %v470
        %v475 = vld [vmem:[#allocation7 + $0x8] sm:$0x1]
        %v476 = vlaneseq
        %v477 = vshrl.u32 %v476, 7
        %v478 = vsub.s32 0, %v477
        %v479 = vrot.slane %v475, %v478
        %481 = vrot.lane.b32.xlu0 %v479, 8
        %v482 = vpop.permute.xlu0 %481
        %v484 = vmul.f32 %v443, %v482
        %v485 = vmul.f32 %v444, %v482
        %488 = vrot.lane.b32.xlu0 %v484, 120
        %v489 = vpop.permute.xlu0 %488
        %490 = vrot.lane.b32.xlu0 %v485, 120
        %v491 = vpop.permute.xlu0 %490
        %v494 = vadd.f32 %v473, %v489
        %v495 = vadd.f32 %v474, %v491
        %v496 = vld [vmem:[#allocation9] sm:$0xff]
        %v497 = vld [vmem:[#allocation9 + $0x8] sm:$0xff]
        %v498 = vld [vmem:[#allocation9 + $0x10] sm:$0xff]
        %v499 = vld [vmem:[#allocation9 + $0x18] sm:$0xff]
        %v500 = vld [vmem:[#allocation9 + $0x20] sm:$0xff]
        %v501 = vld [vmem:[#allocation9 + $0x28] sm:$0xff]
        %v502 = vld [vmem:[#allocation9 + $0x30] sm:$0xff]
        %v503 = vld [vmem:[#allocation9 + $0x38] sm:$0xff]
        %v504 = vld [vmem:[%s3] sm:$0x1]
        %v506 = vlaneseq
        %v507 = vshrl.u32 %v506, 7
        %v508 = vsub.s32 0, %v507
        %v509 = vrot.slane %v504, %v508
        %vm511 = vcmask 523264
        %v513 = vsel %vm511, %v494, 0
        %v516 = vsel %vm511, %v495, 0
        %518 = vmatprep.subr.mxu0 0.0
        %519 = vmatpush1.msra.mxu0 %v496
        %520 = vmatprep.subr.mxu0 0.0
        %521 = vmatpush1.msra.mxu0 %v497
        %522 = vmatprep.subr.mxu0 0.0
        %523 = vmatpush1.msra.mxu0 %v498
        %524 = vmatprep.subr.mxu0 0.0
        %525 = vmatpush1.msra.mxu0 %v499
        %526 = vmatprep.subr.mxu0 0.0
        %527 = vmatpush1.msra.mxu0 %v500
        %528 = vmatprep.subr.mxu0 0.0
        %529 = vmatpush1.msra.mxu0 %v501
        %530 = vmatprep.subr.mxu0 0.0
        %531 = vmatpush1.msra.mxu0 %v502
        %532 = vmatprep.subr.mxu0 0.0
        %533 = vmatpush1.msra.mxu0 %v503
        %534 = vmatprep.subr.mxu0 0.0
        %535 = vmatpush1.msra.mxu0 0.0
        %536 = vmatprep.subr.mxu0 0.0
        %537 = vmatpush1.msra.mxu0 0.0
        %538 = vmatprep.subr.mxu0 0.0
        %539 = vmatpush1.msra.mxu0 0.0
        %540 = vmatprep.subr.mxu0 0.0
        %541 = vmatpush1.msra.mxu0 0.0
        %542 = vmatprep.subr.mxu0 0.0
        %543 = vmatpush1.msra.mxu0 0.0
        %544 = vmatprep.subr.mxu0 0.0
        %545 = vmatpush1.msra.mxu0 0.0
        %546 = vmatprep.subr.mxu0 0.0
        %547 = vmatpush1.msra.mxu0 0.0
        %548 = vmatprep.subr.mxu0 0.0
        %549 = vmatpush1.msra.mxu0 0.0
        %550 = vmatprep.subr.mxu0 0.0
        %551 = vmatpush1.msra.mxu0 0.0
        %552 = vmatprep.subr.mxu0 0.0
        %553 = vmatpush1.msra.mxu0 0.0
        %554 = vmatprep.subr.mxu0 0.0
        %555 = vmatpush1.msra.mxu0 0.0
        %556 = vmatprep.subr.mxu0 0.0
        %557 = vmatpush1.msra.mxu0 0.0
        %558 = vmatprep.subr.mxu0 0.0
        %559 = vmatpush1.msra.mxu0 0.0
        %560 = vmatprep.subr.mxu0 0.0
        %561 = vmatpush1.msra.mxu0 0.0
        %562 = vmatprep.subr.mxu0 0.0
        %563 = vmatpush1.msra.mxu0 0.0
        %564 = vmatprep.subr.mxu0 0.0
        %565 = vmatpush1.msra.mxu0 0.0
        %566 = vmatprep.subr.mxu0 0.0
        %567 = vmatpush1.msra.mxu0 0.0
        %568 = vmatprep.subr.mxu0 0.0
        %569 = vmatpush1.msra.mxu0 0.0
        %570 = vmatprep.subr.mxu0 0.0
        %571 = vmatpush1.msra.mxu0 0.0
        %572 = vmatprep.subr.mxu0 0.0
        %573 = vmatpush1.msra.mxu0 0.0
        %574 = vmatprep.subr.mxu0 0.0
        %575 = vmatpush1.msra.mxu0 0.0
        %576 = vmatprep.subr.mxu0 0.0
        %577 = vmatpush1.msra.mxu0 0.0
        %578 = vmatprep.subr.mxu0 0.0
        %579 = vmatpush1.msra.mxu0 0.0
        %580 = vmatprep.subr.mxu0 0.0
        %581 = vmatpush1.msra.mxu0 0.0
        %582 = vmatprep.mubr.f32.mxu0 0.0
        %583 = vmatmul.mubr.f32.gmra.mrb[0].mxu0 %v513
        %v584 = vpop.f32.mrb[0].mxu0
        %v585 = vadd.f32 %v509, %v584
        %v586 = vpop.f32.mrb[0].mxu0
        %587 = vmatprep.mubr.f32.mxu0 0.0
        %588 = vmatmul.mubr.f32.gmra.mrb[0].mxu0 %v516
        %v589 = vpop.f32.mrb[0].mxu0
        %v590 = vadd.f32 %v509, %v589
        %v591 = vpop.f32.mrb[0].mxu0
        %592 = vdwg.mxu0
        %vm593 = vcmp.gt.f32.partialorder %v585, 0.0
        %vm594 = vcmp.gt.f32.partialorder %v590, 0.0
        %v595 = vmul.f32 %v585, 0.01
        %v596 = vmul.f32 %v590, 0.01
        %v597 = vsel %vm593, %v585, %v595
        %v598 = vsel %vm594, %v590, %v596
        %599 = vst [vmem:[#allocation3 + $0x1] sm:$0xff] %v597
        %600 = vst [vmem:[#allocation3 + $0x9] sm:$0xff] %v598
        %601 = vst [vmem:[#allocation3] sm:$0x1] 0.0
        %602 = vst [vmem:[#allocation3 + $0x11] sm:$0x1] 0.0
        %v603 = vlaneseq
        %v604 = vand.u32 %v603, 127
        %vm605 = vcmp.ge.s32.totalorder %v604, 8
        %vm606 = vcmp.lt.s32.totalorder %v604, 120
        %v607 = vld [vmem:[#allocation3] sm:$0xff]
        %v608 = vld [vmem:[#allocation3 + $0x8] sm:$0xff]
        %609 = vrot.lane.b32.xlu0 %v607, 8
        %v610 = vpop.permute.xlu0 %609
        %611 = vrot.lane.b32.xlu0 %v608, 8
        %v612 = vpop.permute.xlu0 %611
        %v613 = vsel %vm605, %v610, 0.0
        %v614 = vsel %vm605, %v612, 0.0
        %615 = vrot.lane.b32.xlu0 %v607, 120
        %v616 = vpop.permute.xlu0 %615
        %617 = vrot.lane.b32.xlu0 %v608, 120
        %v618 = vpop.permute.xlu0 %617
        %v619 = vsel %vm606, %v616, 0.0
        %v620 = vsel %vm606, %v618, 0.0
        %v621 = vld [vmem:[#allocation10] sm:$0x1]
        %v622 = vlaneseq
        %v623 = vshrl.u32 %v622, 7
        %v624 = vsub.s32 0, %v623
        %v625 = vrot.slane %v621, %v624
        %v626 = vmul.f32 %v613, %v625
        %v627 = vmul.f32 %v614, %v625
        %v628 = vld [vmem:[#allocation10 + $0x1] sm:$0x1]
        %v629 = vlaneseq
        %v630 = vshrl.u32 %v629, 7
        %v631 = vsub.s32 0, %v630
        %v632 = vrot.slane %v628, %v631
        %v633 = vmul.f32 %v607, %v632
        %v634 = vmul.f32 %v608, %v632
        %v635 = vadd.f32 %v626, %v633
        %v636 = vadd.f32 %v627, %v634
        %v637 = vld [vmem:[#allocation10 + $0x2] sm:$0x1]
        %v638 = vlaneseq
        %v639 = vshrl.u32 %v638, 7
        %v640 = vsub.s32 0, %v639
        %v641 = vrot.slane %v637, %v640
        %v642 = vmul.f32 %v619, %v641
        %v643 = vmul.f32 %v620, %v641
        %v644 = vadd.f32 %v635, %v642
        %v645 = vadd.f32 %v636, %v643
        %v646 = vld [vmem:[#allocation3 + $0x1] sm:$0xff]
        %v647 = vld [vmem:[#allocation3 + $0x9] sm:$0xff]
        %648 = vrot.lane.b32.xlu0 %v646, 8
        %v649 = vpop.permute.xlu0 %648
        %650 = vrot.lane.b32.xlu0 %v647, 8
        %v651 = vpop.permute.xlu0 %650
        %v652 = vsel %vm605, %v649, 0.0
        %v653 = vsel %vm605, %v651, 0.0
        %654 = vrot.lane.b32.xlu0 %v646, 120
        %v655 = vpop.permute.xlu0 %654
        %656 = vrot.lane.b32.xlu0 %v647, 120
        %v657 = vpop.permute.xlu0 %656
        %v658 = vsel %vm606, %v655, 0.0
        %v659 = vsel %vm606, %v657, 0.0
        %v660 = vld [vmem:[#allocation10 + $0x3] sm:$0x1]
        %v661 = vlaneseq
        %v662 = vshrl.u32 %v661, 7
        %v663 = vsub.s32 0, %v662
        %v664 = vrot.slane %v660, %v663
        %v665 = vmul.f32 %v652, %v664
        %v666 = vmul.f32 %v653, %v664
        %v667 = vadd.f32 %v644, %v665
        %v668 = vadd.f32 %v645, %v666
        %v669 = vld [vmem:[#allocation10 + $0x4] sm:$0x1]
        %v670 = vlaneseq
        %v671 = vshrl.u32 %v670, 7
        %v672 = vsub.s32 0, %v671
        %v673 = vrot.slane %v669, %v672
        %v674 = vmul.f32 %v646, %v673
        %v675 = vmul.f32 %v647, %v673
        %v676 = vadd.f32 %v667, %v674
        %v677 = vadd.f32 %v668, %v675
        %v678 = vld [vmem:[#allocation10 + $0x5] sm:$0x1]
        %v679 = vlaneseq
        %v680 = vshrl.u32 %v679, 7
        %v681 = vsub.s32 0, %v680
        %v682 = vrot.slane %v678, %v681
        %v683 = vmul.f32 %v658, %v682
        %v684 = vmul.f32 %v659, %v682
        %v685 = vadd.f32 %v676, %v683
        %v686 = vadd.f32 %v677, %v684
        %v687 = vld [vmem:[#allocation3 + $0x2] sm:$0xff]
        %v688 = vld [vmem:[#allocation3 + $0xa] sm:$0xff]
        %689 = vrot.lane.b32.xlu0 %v687, 8
        %v690 = vpop.permute.xlu0 %689
        %691 = vrot.lane.b32.xlu0 %v688, 8
        %v692 = vpop.permute.xlu0 %691
        %v693 = vsel %vm605, %v690, 0.0
        %v694 = vsel %vm605, %v692, 0.0
        %695 = vrot.lane.b32.xlu0 %v687, 120
        %v696 = vpop.permute.xlu0 %695
        %697 = vrot.lane.b32.xlu0 %v688, 120
        %v698 = vpop.permute.xlu0 %697
        %v699 = vsel %vm606, %v696, 0.0
        %v700 = vsel %vm606, %v698, 0.0
        %v701 = vld [vmem:[#allocation10 + $0x6] sm:$0x1]
        %v702 = vlaneseq
        %v703 = vshrl.u32 %v702, 7
        %v704 = vsub.s32 0, %v703
        %v705 = vrot.slane %v701, %v704
        %v706 = vmul.f32 %v693, %v705
        %v707 = vmul.f32 %v694, %v705
        %v708 = vadd.f32 %v685, %v706
        %v709 = vadd.f32 %v686, %v707
        %v710 = vld [vmem:[#allocation10 + $0x7] sm:$0x1]
        %v711 = vlaneseq
        %v712 = vshrl.u32 %v711, 7
        %v713 = vsub.s32 0, %v712
        %v714 = vrot.slane %v710, %v713
        %v715 = vmul.f32 %v687, %v714
        %v716 = vmul.f32 %v688, %v714
        %v717 = vadd.f32 %v708, %v715
        %v718 = vadd.f32 %v709, %v716
        %v719 = vld [vmem:[#allocation10 + $0x8] sm:$0x1]
        %v720 = vlaneseq
        %v721 = vshrl.u32 %v720, 7
        %v722 = vsub.s32 0, %v721
        %v723 = vrot.slane %v719, %v722
        %v724 = vmul.f32 %v699, %v723
        %v725 = vmul.f32 %v700, %v723
        %v726 = vadd.f32 %v717, %v724
        %v727 = vadd.f32 %v718, %v725
        %v728 = vld [vmem:[%s5] sm:$0x1]
        %v730 = vlaneseq
        %v731 = vshrl.u32 %v730, 7
        %v732 = vsub.s32 0, %v731
        %v733 = vrot.slane %v728, %v732
        %v735 = vadd.f32 %v726, %v733
        %v736 = vadd.f32 %v727, %v733
        %vm737 = vcmp.gt.f32.partialorder %v735, 0.0
        %vm738 = vcmp.gt.f32.partialorder %v736, 0.0
        %v739 = vmul.f32 %v735, 0.01
        %v740 = vmul.f32 %v736, 0.01
        %v741 = vsel %vm737, %v735, %v739
        %v742 = vsel %vm738, %v736, %v740
        %743 = vst [vmem:[%s313] sm:$0xff] %v741
        %744 = vst [vmem:[%s313 + $0x8] sm:$0xff] %v742
        %s745 = sand.u32 %s164, 1
        %s746 = scalar_lea.sflag [#allocation6], %s745
        %s747 = sand.u32 %s164, 1
        %s748 = smul.addr %s747, 16
        %s749 = scalar_lea.vmem [#allocation12], %s748
        // Predicated region
        $region61: #{tpu_custom_call.1} parent=43 // pred_check
          %p750 = pneg %p174
        $region62: #{tpu_custom_call.1} parent=43 // pred_check_branch
          %752 = sbr.rel (%p750) target = $region64
        $region63: #{tpu_custom_call.1} parent=43 // pred_region
          %s754 = ssub.s32 256, 256
          %755 = vsyncadd %s746, %s754
          %s756 = smul.addr %s25, 2
          %s757 = smul.addr %s756, 128
          %s758 = scalar_lea.hbm %s6, %s757
          %s759 = sshll.u32 %s749, 4
          %s760 = int_to_ptr.vmem [resolvable:$true] %s759
          %765 = dma.vmem_to_hbm [thread:$0]  %s760, 256, %s758, %s746, 128, 128, 8
        $region64: #{tpu_custom_call.1} parent=43 // pred_fallthru
          _
      $region44: #{tpu_custom_call.1} parent=5 // pred_fallthru
        _
      %p766 = scmp.le.s32.totalorder 2, %s20
      // Predicated region
      $region65: #{tpu_custom_call.1} parent=5 // pred_check
        %p767 = pneg %p766
      $region66: #{tpu_custom_call.1} parent=5 // pred_check_branch
        %769 = sbr.rel (%p767) target = $region68
      $region67: #{tpu_custom_call.1} parent=5 // pred_region
        %s770 = ssub.s32 %s20, 2
        // Predicated region
        $region69: #{tpu_custom_call.1} parent=67 // pred_check
          %p771 = pneg %p180
        $region70: #{tpu_custom_call.1} parent=67 // pred_check_branch
          %773 = sbr.rel (%p771) target = $region72
        $region71: #{tpu_custom_call.1} parent=67 // pred_region
          %s774 = sand.u32 %s165, 1
          %s775 = scalar_lea.sflag [#allocation6], %s774
          %s776 = sand.u32 %s165, 1
          %s777 = smul.addr %s776, 16
          %s778 = scalar_lea.vmem [#allocation12], %s777
          %779 = dma.done %s775, 256
        $region72: #{tpu_custom_call.1} parent=67 // pred_fallthru
          _
      $region68: #{tpu_custom_call.1} parent=5 // pred_fallthru
        _
    $region6: #{tpu_custom_call.1} parent=1 // loop_footer
      %s24 = sadd.s32 1, %s20
    $region7: #{tpu_custom_call.1} parent=1 // loop_footer_branch
      %19 = sbr.rel target = $region3
    $region8: #{tpu_custom_call.1} parent=1 // loop_exit
      _
    %780 = vsyncpa [#allocation5], 1
    %s781 = scalar_lea.sflag [#allocation5], 1
    %782 = vsyncpa %s781, 1
    %783 = vsyncpa [#allocation8], 1
    %784 = vsyncpa [#allocation11], 1
    %785 = vsyncpa [#allocation6], 1
    %s786 = scalar_lea.sflag [#allocation6], 1
    %787 = vsyncpa %s786, 1

</llo_original>
